<compile_context>
chip_gen: v7x
topology: tpu7x:2x2x1
jax: 0.10.0
libtpu: 0.0.40
codegen_flags: <defaults>
</compile_context>

<pallas_src>
import jax
import jax.numpy as jnp
from jax.experimental import pallas as pl
from jax.experimental.pallas import tpu as pltpu

# ----------------------------------------------------------------------------
# Config (shapes implied by FusedSimilarityNet.__init__)
# ----------------------------------------------------------------------------
CFG = dict(
    FUSED=True,
    FSI_TYPE="CONCAT_ATTN",
    RESNET_FC_IN=128,          # pooled backbone feature width (512 in real resnet18)
    RESNET_FC1_OUT=128,
    RESNET_FC2_OUT=64,
    GENDER_NUM_EMBED=2,              GENDER_EMBED_DIM=8,
    AGE_NUM_EMBED=5,                 AGE_EMBED_DIM=8,
    BODY_SHAPE_NUM_EMBED=3,          BODY_SHAPE_EMBED_DIM=8,
    ATTACHMENT_NUM_EMBED=4,          ATTACHMENT_EMBED_DIM=8,
    UPPER_BODY_CLOTHING_NUM_EMBED=6, UPPER_BODY_CLOTHING_EMBED_DIM=16,
    LOWER_BODY_CLOTHING_NUM_EMBED=6, LOWER_BODY_CLOTHING_EMBED_DIM=16,
    EMBED_FC1_OUT=128,
    EMBED_FC2_OUT=64,          # must equal RESNET_FC2_OUT for the CONCAT_ATTN branch
    FC1_OUT=128,
    FC2_OUT=64,
    ATTN_NO_HEADS=8,
)

_ATTR_NAMES = ["GENDER", "AGE", "BODY_SHAPE", "ATTACHMENT",
               "UPPER_BODY_CLOTHING", "LOWER_BODY_CLOTHING"]
N_ATTR = len(_ATTR_NAMES)

EMBED_FC_IN = sum(CFG[f"{n}_EMBED_DIM"] for n in _ATTR_NAMES)      # = 64
FSI_IN = CFG["EMBED_FC2_OUT"] + CFG["RESNET_FC2_OUT"]              # CONCAT_ATTN -> 128

# row offsets of each attribute inside the stacked block-diagonal table
ATTR_ROW_OFFSETS = []
_acc = 0
for _n in _ATTR_NAMES:
    ATTR_ROW_OFFSETS.append(_acc)
    _acc += CFG[f"{_n}_NUM_EMBED"]
TOTAL_EMBED_ROWS = _acc                 # 26 (fits a single int32 bitmask per row)
ONE_HOT_PAD = 32                        # padded one-hot width (8-sublane friendly)
OUT_PAD = 128                           # lane-dense output width (sliced to 64 outside)

# TODO(synk): the frozen pretrained ResNet18 convolutional backbone is not
# re-implemented (pretrained weights cannot be materialized in-script); the
# kernel starts from its global-average-pooled feature vector.


def _round_up(x, m):
    return ((x + m - 1) // m) * m


# ----------------------------------------------------------------------------
# Kernel: one batch tile per grid step (4 MXU dots)
# ----------------------------------------------------------------------------
def fsinet_kernel(
    feat_ref,    # (TB, 128) f32 pooled backbone features (cast to bf16 in-kernel)
    bits_ref,    # (TB, 1)   int32 packed one-hot bitmask over all 6 attributes
    rw1_ref, rb1_ref,        # resnet.fc[0]                (128,128) bf16 / (1,128) f32
    wemb_ref, eb1_ref,       # stacked-embed @ embed_fc[0] (32,128)  bf16 / (1,128) f32
    w2_ref, b2_ref,          # fused [h|eh] -> fsi hidden  (256,128) bf16 / (1,128) f32
    w3_ref, b3_ref,          # fsi_out[3] padded           (128,128) bf16 / (1,128) f32
    out_ref,                 # (TB, 128) bf16 (cols >= 64 are exactly zero)
):
    feat = feat_ref[...]                                   # (TB, 128) f32
    tb = feat.shape[0]

    # ---- fused one-hot for all 6 attributes from one packed bitmask ----
    iota = jax.lax.broadcasted_iota(jnp.int32, (tb, ONE_HOT_PAD), 1)
    bits = jnp.broadcast_to(bits_ref[...], (tb, ONE_HOT_PAD))
    oh = (jax.lax.shift_right_logical(bits, iota) & 1).astype(jnp.bfloat16)

    # ---- resnet.fc[0] + ReLU (Dropout = identity in eval) ----
    h = jnp.maximum(
        jnp.dot(feat.astype(jnp.bfloat16), rw1_ref[...],
                preferred_element_type=jnp.float32) + rb1_ref[...], 0.0)   # (TB,128) f32

    # ---- embeddings folded into embed_fc[0] + ReLU ----
    eh = jnp.maximum(
        jnp.dot(oh, wemb_ref[...],
                preferred_element_type=jnp.float32) + eb1_ref[...], 0.0)   # (TB,128) f32

    # ---- fused: embed_fc[3] / resnet.fc[3] -> seq-1 MHA (v/out proj) ->
    #      concat -> fsi_out[0], all pre-composed offline and stacked so the
    #      two K=128 dots become ONE K=256 dot (full 256-deep MXU on v6e/v7x) ----
    he = jnp.concatenate([h.astype(jnp.bfloat16), eh.astype(jnp.bfloat16)], axis=1)
    fh = jnp.maximum(
        jnp.dot(he, w2_ref[...], preferred_element_type=jnp.float32)
        + b2_ref[...], 0.0)                                                # (TB,128) f32

    # ---- fsi_out[3], padded to 128 lanes (cols >= 64 are zero weights/bias) ----
    out = jnp.dot(fh.astype(jnp.bfloat16), w3_ref[...],
                  preferred_element_type=jnp.float32) + b3_ref[...]

    # ---- L2 normalisation (EUP rsqrt + eps; zero pad-cols don't contribute) ----
    inv = jax.lax.rsqrt(jnp.sum(out * out, axis=1, keepdims=True) + 1e-12)
    out_ref[...] = (out * inv).astype(out_ref.dtype)       # lane-dense bf16 store


# ----------------------------------------------------------------------------
# Raw (PyTorch-style) parameter initialisation
# ----------------------------------------------------------------------------
def _dense(key, n_in, n_out, scale=0.05):
    kw, kb = jax.random.split(key)
    w = scale * jax.random.normal(kw, (n_in, n_out), jnp.float32)   # (in, out)
    b = scale * jax.random.normal(kb, (1, n_out), jnp.float32)
    return w, b


def _mha_params(key, e):
    k = jax.random.split(key, 4)
    wq, bq = _dense(k[0], e, e)
    wk, bk = _dense(k[1], e, e)
    wv, bv = _dense(k[2], e, e)
    wo, bo = _dense(k[3], e, e)
    return [wq, bq, wk, bk, wv, bv, wo, bo]


def init_params(key):
    ks = jax.random.split(key, 16)
    p = []
    w, b = _dense(ks[0], CFG["RESNET_FC_IN"], CFG["RESNET_FC1_OUT"]); p += [w, b]
    w, b = _dense(ks[1], CFG["RESNET_FC1_OUT"], CFG["RESNET_FC2_OUT"]); p += [w, b]
    for name, k in zip(_ATTR_NAMES, ks[2:8]):
        p.append(0.1 * jax.random.normal(
            k, (CFG[f"{name}_NUM_EMBED"], CFG[f"{name}_EMBED_DIM"]), jnp.float32))
    w, b = _dense(ks[8], EMBED_FC_IN, CFG["EMBED_FC1_OUT"]); p += [w, b]
    w, b = _dense(ks[9], CFG["EMBED_FC1_OUT"], CFG["EMBED_FC2_OUT"]); p += [w, b]
    p += _mha_params(ks[10], CFG["EMBED_FC2_OUT"])   # img_attn
    p += _mha_params(ks[11], CFG["EMBED_FC2_OUT"])   # embed_attn
    w, b = _dense(ks[12], FSI_IN, CFG["FC1_OUT"]); p += [w, b]
    w, b = _dense(ks[13], CFG["FC1_OUT"], CFG["FC2_OUT"]); p += [w, b]
    return p


# ----------------------------------------------------------------------------
# Offline weight fusion (frozen weights, eval mode => exact up to fp reassoc.)
# Composition stays f32; only the final fused matrices are cast to bf16.
# ----------------------------------------------------------------------------
def build_fused_params(raw):
    (rw1, rb1, rw2, rb2,
     t_g, t_a, t_b, t_at, t_u, t_l,
     ew1, eb1, ew2, eb2,
     ia_wq, ia_bq, ia_wk, ia_bk, ia_wv, ia_bv, ia_wo, ia_bo,
     ea_wq, ea_bq, ea_wk, ea_bk, ea_wv, ea_bv, ea_wo, ea_bo,
     fw1, fb1, fw2, fb2) = raw

    e = CFG["EMBED_FC2_OUT"]

    # seq-len-1 MultiheadAttention: softmax over a single key is exactly 1.0,
    # so attention == out_proj(v_proj(value)); q/k projections cannot matter.
    W_ia = ia_wv @ ia_wo
    b_ia = ia_bv @ ia_wo + ia_bo
    W_ea = ea_wv @ ea_wo
    b_ea = ea_bv @ ea_wo + ea_bo

    # concat([img_attn_out, embed_attn_out]) @ fw1 split into its two halves,
    # then folded through the second linears of resnet.fc / embed_fc.
    fw1_top, fw1_bot = fw1[:e, :], fw1[e:, :]
    WE_half = W_ia @ fw1_top                 # embed_f path (64,128)
    WI_half = W_ea @ fw1_bot                 # img_f   path (64,128)
    w_e = ew2 @ WE_half                      # (128,128), applied to post-ReLU eh
    w_i = rw2 @ WI_half                      # (128,128), applied to post-ReLU h
    b_fused = (eb2 @ WE_half + rb2 @ WI_half
               + b_ia @ fw1_top + b_ea @ fw1_bot + fb1)     # (1,128)

    # stack the two halves so the kernel runs ONE K=256 dot on [h | eh]
    w2 = jnp.concatenate([w_i, w_e], axis=0)                # (256,128)

    # block-diagonal stacked embedding table, folded into embed_fc[0] weight
    tables = [t_g, t_a, t_b, t_at, t_u, t_l]
    T = jnp.zeros((ONE_HOT_PAD, EMBED_FC_IN), jnp.float32)
    r = c = 0
    for t in tables:
        n, d = t.shape
        T = T.at[r:r + n, c:c + d].set(t)
        r += n
        c += d
    w_emb = T @ ew1                          # (32,128)

    # pad the final linear to 128 output lanes => lane-dense unmasked bf16 store
    w3p = jnp.zeros((CFG["FC1_OUT"], OUT_PAD), jnp.float32).at[:, :CFG["FC2_OUT"]].set(fw2)
    b3p = jnp.zeros((1, OUT_PAD), jnp.float32).at[:, :CFG["FC2_OUT"]].set(fb2)

    bf16 = lambda x: x.astype(jnp.bfloat16)
    return (bf16(rw1), rb1, bf16(w_emb), eb1,
            bf16(w2), b_fused, bf16(w3p), b3p)


# ----------------------------------------------------------------------------
# Wrapper: batch-tiled pallas_call
# ----------------------------------------------------------------------------
def fsinet_forward(pooled_feat, attr_idxs, fused, tile_b=None, slice_output=True):
    """forward_one for one input dict {'imageVal': ..., 'attrIdxs': ...};
    pooled_feat stands in for the frozen ResNet18 backbone output (f32)."""
    B, d_in = pooled_feat.shape

    if tile_b is None:
        CAP = 1024   # ~3.5 MiB/tile of VMEM -> fits v5e's 16 MiB default scoped limit
        if B <= 32:
            tile_b = max(16, _round_up(B, 16))
        else:
            # >=2 tiles, even count => both v7x TensorCores busy; tile sized so
            # padding never adds a nearly-empty tile.
            n_tiles = _round_up(max(2, pl.cdiv(B, CAP)), 2)
            tile_b = min(CAP, _round_up(pl.cdiv(B, n_tiles), 16))
    b_pad = _round_up(B, tile_b)

    # pack the 6 shifted one-hot indices into a single int32 bitmask per row
    # (note: out-of-range attr indices would silently alias a neighbouring
    # attribute's rows instead of erroring like nn.Embedding)
    offs = jnp.asarray(ATTR_ROW_OFFSETS, jnp.int32)[None, :]
    bits = jnp.sum(jnp.left_shift(jnp.int32(1), attr_idxs.astype(jnp.int32) + offs),
                   axis=1, keepdims=True).astype(jnp.int32)          # (B,1)

    feat = pooled_feat   # stays f32: bf16 cast happens in-kernel (no wrapper pass)
    if b_pad != B:
        feat = jnp.pad(feat, ((0, b_pad - B), (0, 0)))
        bits = jnp.pad(bits, ((0, b_pad - B), (0, 0)))

    (rw1, rb1, w_emb, eb1, w2, b2, w3p, b3p) = fused

    def resident(a):   # weights stay VMEM-resident across batch tiles
        return pl.BlockSpec(a.shape, lambda i: (0, 0))

    # advisory cost hint for XLA scheduling around the custom call
    flops_row = 2 * (ONE_HOT_PAD * 128 + d_in * 128 + 256 * 128 + 128 * OUT_PAD)
    w_bytes = sum(int(a.size) * a.dtype.itemsize for a in fused)
    cost = pl.CostEstimate(
        flops=int(b_pad) * flops_row,
        transcendentals=int(b_pad),
        bytes_accessed=int(b_pad) * (d_in * 4 + 4 + OUT_PAD * 2) + w_bytes)

    out_pad = pl.pallas_call(
        fsinet_kernel,
        out_shape=jax.ShapeDtypeStruct((b_pad, OUT_PAD), jnp.bfloat16),
        grid=(b_pad // tile_b,),
        in_specs=[
            pl.BlockSpec((tile_b, d_in), lambda i: (i, 0)),
            pl.BlockSpec((tile_b, 1), lambda i: (i, 0)),
            resident(rw1), resident(rb1),
            resident(w_emb), resident(eb1),
            resident(w2), resident(b2),
            resident(w3p), resident(b3p),
        ],
        out_specs=pl.BlockSpec((tile_b, OUT_PAD), lambda i: (i, 0)),
        compiler_params=pltpu.CompilerParams(
            dimension_semantics=("parallel",)),      # shards tiles across v7x's 2 TCs
        cost_estimate=cost,
    )(feat, bits, rw1, rb1, w_emb, eb1, w2, b2, w3p, b3p)

    if not slice_output:
        return out_pad                           # (b_pad, 128) bf16, cols >= 64 zero
    return out_pad[:B, :CFG["FC2_OUT"]]          # cheap: bf16, 256 B/row


# ----------------------------------------------------------------------------
# Pure-JAX reference (unfused, f32) for validation
# ----------------------------------------------------------------------------
def reference_forward(feat, idx, raw):
    (rw1, rb1, rw2, rb2,
     t_g, t_a, t_b, t_at, t_u, t_l,
     ew1, eb1, ew2, eb2,
     ia_wq, ia_bq, ia_wk, ia_bk, ia_wv, ia_bv, ia_wo, ia_bo,
     ea_wq, ea_bq, ea_wk, ea_bk, ea_wv, ea_bv, ea_wo, ea_bo,
     fw1, fb1, fw2, fb2) = raw
    relu = lambda x: jnp.maximum(x, 0.0)
    h = relu(feat @ rw1 + rb1)
    img_f = h @ rw2 + rb2
    tables = [t_g, t_a, t_b, t_at, t_u, t_l]
    embed_base = jnp.concatenate([t[idx[:, j]] for j, t in enumerate(tables)], axis=1)
    eh = relu(embed_base @ ew1 + eb1)
    embed_f = eh @ ew2 + eb2
    # seq-len-1 MHA: softmax over a single key == 1 -> out_proj(v_proj(value))
    img_attn_out = (embed_f @ ia_wv + ia_bv) @ ia_wo + ia_bo
    embed_attn_out = (img_f @ ea_wv + ea_bv) @ ea_wo + ea_bo
    cat = jnp.concatenate([img_attn_out, embed_attn_out], axis=1)
    out = relu(cat @ fw1 + fb1) @ fw2 + fb2
    return out / jnp.sqrt(jnp.sum(out * out, axis=1, keepdims=True) + 1e-12)


# ----------------------------------------------------------------------------
if __name__ == "__main__":
    B = 2
    key = jax.random.PRNGKey(0)
    k_feat, k_idx, k_par = jax.random.split(key, 3)

    pooled_feat = jax.random.normal(k_feat, (B, CFG["RESNET_FC_IN"]), jnp.float32)
    max_ids = jnp.array([CFG[f"{n}_NUM_EMBED"] for n in _ATTR_NAMES], jnp.int32)
    attr_idxs = (jax.random.randint(k_idx, (B, N_ATTR), 0, 1_000_000, jnp.int32)
                 % max_ids).astype(jnp.int32)

    raw = init_params(k_par)
    fused = build_fused_params(raw)

    out = fsinet_forward(pooled_feat, attr_idxs, fused)
    out = jax.block_until_ready(out)

    assert out.shape == (B, CFG["FC2_OUT"])
    assert bool(jnp.all(jnp.isfinite(out)))

    outf = out.astype(jnp.float32)
    row_norms = jnp.sqrt(jnp.sum(outf * outf, axis=1))
    assert bool(jnp.all(jnp.abs(row_norms - 1.0) < 5e-3))   # L2-normalised (bf16 store)

    ref = reference_forward(pooled_feat, attr_idxs, raw)
    assert float(jnp.max(jnp.abs(outf - ref))) < 6e-2       # bf16-weight tolerance
    print("KERNEL_OK")
</pallas_src>

<mosaic_0001>
module attributes {stable_mosaic.version = 11 : i64} {
  func.func @fsinet_kernel(%arg0: i32, %arg1: memref<16x128xf32, #tpu.memory_space<vmem>>, %arg2: memref<16x1xi32, #tpu.memory_space<vmem>>, %arg3: memref<128x128xbf16, #tpu.memory_space<vmem>>, %arg4: memref<1x128xf32, #tpu.memory_space<vmem>>, %arg5: memref<32x128xbf16, #tpu.memory_space<vmem>>, %arg6: memref<1x128xf32, #tpu.memory_space<vmem>>, %arg7: memref<256x128xbf16, #tpu.memory_space<vmem>>, %arg8: memref<1x128xf32, #tpu.memory_space<vmem>>, %arg9: memref<128x128xbf16, #tpu.memory_space<vmem>>, %arg10: memref<1x128xf32, #tpu.memory_space<vmem>>, %arg11: memref<16x128xbf16, #tpu.memory_space<vmem>>) attributes {dimension_semantics = [#tpu.dimension_semantics<parallel>], iteration_bounds = array<i64: 1>, scalar_prefetch = 0 : i64, scratch_operands = 0 : i64, tpu.core_type = #tpu.core_type<tc>, window_params = [{transform_indices = @transform_0, window_bounds = array<i64: 16, 128>}, {transform_indices = @transform_1, window_bounds = array<i64: 16, 1>}, {pipeline_mode = #tpu.pipeline_mode<synchronous>, transform_indices = @transform_2, window_bounds = array<i64: 128, 128>}, {pipeline_mode = #tpu.pipeline_mode<synchronous>, transform_indices = @transform_3, window_bounds = array<i64: 1, 128>}, {pipeline_mode = #tpu.pipeline_mode<synchronous>, transform_indices = @transform_4, window_bounds = array<i64: 32, 128>}, {pipeline_mode = #tpu.pipeline_mode<synchronous>, transform_indices = @transform_5, window_bounds = array<i64: 1, 128>}, {pipeline_mode = #tpu.pipeline_mode<synchronous>, transform_indices = @transform_6, window_bounds = array<i64: 256, 128>}, {pipeline_mode = #tpu.pipeline_mode<synchronous>, transform_indices = @transform_7, window_bounds = array<i64: 1, 128>}, {pipeline_mode = #tpu.pipeline_mode<synchronous>, transform_indices = @transform_8, window_bounds = array<i64: 128, 128>}, {pipeline_mode = #tpu.pipeline_mode<synchronous>, transform_indices = @transform_9, window_bounds = array<i64: 1, 128>}, {transform_indices = @transform_10, window_bounds = array<i64: 16, 128>}]} {
    %c0 = arith.constant 0 : index
    %c0_0 = arith.constant 0 : index
    %0 = vector.load %arg1[%c0, %c0_0] : memref<16x128xf32, #tpu.memory_space<vmem>>, vector<16x128xf32>
    %1 = tpu.iota {dimensions = array<i32: 1>} : vector<16x32xi32>
    %c0_1 = arith.constant 0 : index
    %c0_2 = arith.constant 0 : index
    %2 = vector.load %arg2[%c0_1, %c0_2] : memref<16x1xi32, #tpu.memory_space<vmem>>, vector<16x1xi32>
    %3 = vector.shape_cast %2 : vector<16x1xi32> to vector<16x1xi32>
    %4 = vector.broadcast %3 : vector<16x1xi32> to vector<16x32xi32>
    %5 = arith.shrui %4, %1 : vector<16x32xi32>
    %c1_i32 = arith.constant 1 : i32
    %6 = vector.broadcast %c1_i32 : i32 to vector<16x32xi32>
    %7 = arith.andi %5, %6 : vector<16x32xi32>
    %8 = arith.sitofp %7 : vector<16x32xi32> to vector<16x32xbf16>
    %9 = arith.truncf %0 : vector<16x128xf32> to vector<16x128xbf16>
    %c0_3 = arith.constant 0 : index
    %c0_4 = arith.constant 0 : index
    %10 = vector.load %arg3[%c0_3, %c0_4] : memref<128x128xbf16, #tpu.memory_space<vmem>>, vector<128x128xbf16>
    %cst = arith.constant dense<0.000000e+00> : vector<16x128xf32>
    %11 = tpu.matmul %9, %10, %cst {dimension_numbers = #tpu.dot_dimension_numbers<[1], [0], [0], [1], [0, 0, 1, 1], [], []>} : vector<16x128xbf16>, vector<128x128xbf16>, vector<16x128xf32> -> vector<16x128xf32>
    %c0_5 = arith.constant 0 : index
    %c0_6 = arith.constant 0 : index
    %12 = vector.load %arg4[%c0_5, %c0_6] : memref<1x128xf32, #tpu.memory_space<vmem>>, vector<1x128xf32>
    %13 = vector.broadcast %12 : vector<1x128xf32> to vector<16x128xf32>
    %14 = arith.addf %11, %13 : vector<16x128xf32>
    %cst_7 = arith.constant 0.000000e+00 : f32
    %15 = vector.broadcast %cst_7 : f32 to vector<16x128xf32>
    %16 = arith.maximumf %14, %15 : vector<16x128xf32>
    %c0_8 = arith.constant 0 : index
    %c0_9 = arith.constant 0 : index
    %17 = vector.load %arg5[%c0_8, %c0_9] : memref<32x128xbf16, #tpu.memory_space<vmem>>, vector<32x128xbf16>
    %cst_10 = arith.constant dense<0.000000e+00> : vector<16x128xf32>
    %18 = tpu.matmul %8, %17, %cst_10 {dimension_numbers = #tpu.dot_dimension_numbers<[1], [0], [0], [1], [0, 0, 1, 1], [], []>} : vector<16x32xbf16>, vector<32x128xbf16>, vector<16x128xf32> -> vector<16x128xf32>
    %c0_11 = arith.constant 0 : index
    %c0_12 = arith.constant 0 : index
    %19 = vector.load %arg6[%c0_11, %c0_12] : memref<1x128xf32, #tpu.memory_space<vmem>>, vector<1x128xf32>
    %20 = vector.broadcast %19 : vector<1x128xf32> to vector<16x128xf32>
    %21 = arith.addf %18, %20 : vector<16x128xf32>
    %cst_13 = arith.constant 0.000000e+00 : f32
    %22 = vector.broadcast %cst_13 : f32 to vector<16x128xf32>
    %23 = arith.maximumf %21, %22 : vector<16x128xf32>
    %24 = arith.truncf %16 : vector<16x128xf32> to vector<16x128xbf16>
    %25 = arith.truncf %23 : vector<16x128xf32> to vector<16x128xbf16>
    %26 = tpu.concatenate %24, %25 in 1 : vector<16x128xbf16>, vector<16x128xbf16> -> vector<16x256xbf16>
    %c0_14 = arith.constant 0 : index
    %c0_15 = arith.constant 0 : index
    %27 = vector.load %arg7[%c0_14, %c0_15] : memref<256x128xbf16, #tpu.memory_space<vmem>>, vector<256x128xbf16>
    %cst_16 = arith.constant dense<0.000000e+00> : vector<16x128xf32>
    %28 = tpu.matmul %26, %27, %cst_16 {dimension_numbers = #tpu.dot_dimension_numbers<[1], [0], [0], [1], [0, 0, 1, 1], [], []>} : vector<16x256xbf16>, vector<256x128xbf16>, vector<16x128xf32> -> vector<16x128xf32>
    %c0_17 = arith.constant 0 : index
    %c0_18 = arith.constant 0 : index
    %29 = vector.load %arg8[%c0_17, %c0_18] : memref<1x128xf32, #tpu.memory_space<vmem>>, vector<1x128xf32>
    %30 = vector.broadcast %29 : vector<1x128xf32> to vector<16x128xf32>
    %31 = arith.addf %28, %30 : vector<16x128xf32>
    %cst_19 = arith.constant 0.000000e+00 : f32
    %32 = vector.broadcast %cst_19 : f32 to vector<16x128xf32>
    %33 = arith.maximumf %31, %32 : vector<16x128xf32>
    %34 = arith.truncf %33 : vector<16x128xf32> to vector<16x128xbf16>
    %c0_20 = arith.constant 0 : index
    %c0_21 = arith.constant 0 : index
    %35 = vector.load %arg9[%c0_20, %c0_21] : memref<128x128xbf16, #tpu.memory_space<vmem>>, vector<128x128xbf16>
    %cst_22 = arith.constant dense<0.000000e+00> : vector<16x128xf32>
    %36 = tpu.matmul %34, %35, %cst_22 {dimension_numbers = #tpu.dot_dimension_numbers<[1], [0], [0], [1], [0, 0, 1, 1], [], []>} : vector<16x128xbf16>, vector<128x128xbf16>, vector<16x128xf32> -> vector<16x128xf32>
    %c0_23 = arith.constant 0 : index
    %c0_24 = arith.constant 0 : index
    %37 = vector.load %arg10[%c0_23, %c0_24] : memref<1x128xf32, #tpu.memory_space<vmem>>, vector<1x128xf32>
    %38 = vector.broadcast %37 : vector<1x128xf32> to vector<16x128xf32>
    %39 = arith.addf %36, %38 : vector<16x128xf32>
    %40 = arith.mulf %39, %39 : vector<16x128xf32>
    %cst_25 = arith.constant dense<0.000000e+00> : vector<16xf32>
    %41 = vector.multi_reduction <add>, %40, %cst_25 [1] : vector<16x128xf32> to vector<16xf32>
    %42 = vector.shape_cast %41 : vector<16xf32> to vector<16x1xf32>
    %cst_26 = arith.constant 9.99999996E-13 : f32
    %43 = vector.broadcast %cst_26 : f32 to vector<16x1xf32>
    %44 = arith.addf %42, %43 : vector<16x1xf32>
    %45 = math.rsqrt %44 : vector<16x1xf32>
    %46 = vector.broadcast %45 : vector<16x1xf32> to vector<16x128xf32>
    %47 = arith.mulf %39, %46 : vector<16x128xf32>
    %48 = arith.truncf %47 : vector<16x128xf32> to vector<16x128xbf16>
    %c0_27 = arith.constant 0 : index
    %c0_28 = arith.constant 0 : index
    %49 = vector.load %arg11[%c0_27, %c0_28] : memref<16x128xbf16, #tpu.memory_space<vmem>>, vector<16x128xbf16>
    tpu.vector_store %arg11[%c0_27, %c0_28], %48 {strides = array<i32>} : memref<16x128xbf16, #tpu.memory_space<vmem>>, vector<16x128xbf16>,
    return
  }
  func.func @transform_0(%arg0: i32) -> (i32, i32) {
    %c0_i32 = arith.constant 0 : i32
    %c0_i32_0 = arith.constant 0 : i32
    return %arg0, %c0_i32 : i32, i32
  }
  func.func @transform_1(%arg0: i32) -> (i32, i32) {
    %c0_i32 = arith.constant 0 : i32
    %c0_i32_0 = arith.constant 0 : i32
    return %arg0, %c0_i32 : i32, i32
  }
  func.func @transform_2(%arg0: i32) -> (i32, i32) {
    %c0_i32 = arith.constant 0 : i32
    %c0_i32_0 = arith.constant 0 : i32
    %c0_i32_1 = arith.constant 0 : i32
    return %c0_i32, %c0_i32_0 : i32, i32
  }
  func.func @transform_3(%arg0: i32) -> (i32, i32) {
    %c0_i32 = arith.constant 0 : i32
    %c0_i32_0 = arith.constant 0 : i32
    %c0_i32_1 = arith.constant 0 : i32
    return %c0_i32, %c0_i32_0 : i32, i32
  }
  func.func @transform_4(%arg0: i32) -> (i32, i32) {
    %c0_i32 = arith.constant 0 : i32
    %c0_i32_0 = arith.constant 0 : i32
    %c0_i32_1 = arith.constant 0 : i32
    return %c0_i32, %c0_i32_0 : i32, i32
  }
  func.func @transform_5(%arg0: i32) -> (i32, i32) {
    %c0_i32 = arith.constant 0 : i32
    %c0_i32_0 = arith.constant 0 : i32
    %c0_i32_1 = arith.constant 0 : i32
    return %c0_i32, %c0_i32_0 : i32, i32
  }
  func.func @transform_6(%arg0: i32) -> (i32, i32) {
    %c0_i32 = arith.constant 0 : i32
    %c0_i32_0 = arith.constant 0 : i32
    %c0_i32_1 = arith.constant 0 : i32
    return %c0_i32, %c0_i32_0 : i32, i32
  }
  func.func @transform_7(%arg0: i32) -> (i32, i32) {
    %c0_i32 = arith.constant 0 : i32
    %c0_i32_0 = arith.constant 0 : i32
    %c0_i32_1 = arith.constant 0 : i32
    return %c0_i32, %c0_i32_0 : i32, i32
  }
  func.func @transform_8(%arg0: i32) -> (i32, i32) {
    %c0_i32 = arith.constant 0 : i32
    %c0_i32_0 = arith.constant 0 : i32
    %c0_i32_1 = arith.constant 0 : i32
    return %c0_i32, %c0_i32_0 : i32, i32
  }
  func.func @transform_9(%arg0: i32) -> (i32, i32) {
    %c0_i32 = arith.constant 0 : i32
    %c0_i32_0 = arith.constant 0 : i32
    %c0_i32_1 = arith.constant 0 : i32
    return %c0_i32, %c0_i32_0 : i32, i32
  }
  func.func @transform_10(%arg0: i32) -> (i32, i32) {
    %c0_i32 = arith.constant 0 : i32
    %c0_i32_0 = arith.constant 0 : i32
    return %arg0, %c0_i32 : i32, i32
  }
}

</mosaic_0001>

<llo_original>
// kernel: tpu_custom_call.1
$region0: #{tpu_custom_call.1}
  #allocation0 [shape = 'u32[]', space=smem, size = 0x4, offset = 0x4, fixed_abs, tag = 'smem constant byte address 0x4 - core index']
  #allocation1 [shape = 'u32[144,128]{1,0:T(1,128)}', space=vmem, size = 0x12000, scoped, tag = 'internal scratch']
  %s0 = inlined_call_operand.vmem [shape: f32[16,128], index: 0, kind: input, shape index: {}]
  %s1 = inlined_call_operand.vmem [shape: s32[16,1], index: 1, kind: input, shape index: {}]
  %s2 = inlined_call_operand.hbm [shape: bf16[128,128], index: 2, kind: input, shape index: {}]
  %s3 = inlined_call_operand.hbm [shape: f32[1,128], index: 3, kind: input, shape index: {}]
  %s4 = inlined_call_operand.vmem [shape: bf16[32,128], index: 4, kind: input, shape index: {}]
  %s5 = inlined_call_operand.vmem [shape: f32[1,128], index: 5, kind: input, shape index: {}]
  %s6 = inlined_call_operand.hbm [shape: bf16[256,128], index: 6, kind: input, shape index: {}]
  %s7 = inlined_call_operand.vmem [shape: f32[1,128], index: 7, kind: input, shape index: {}]
  %s8 = inlined_call_operand.hbm [shape: bf16[128,128], index: 8, kind: input, shape index: {}]
  %s9 = inlined_call_operand.vmem [shape: f32[1,128], index: 9, kind: input, shape index: {}]
  %s10 = inlined_call_operand.hbm [shape: bf16[16,128], index: 10, kind: output, shape index: {}]
  %s11 = sld [smem:[#allocation0]]
  $region66: #{tpu_custom_call.1} parent=0
    _
  %s13 = ssub.s32 1, %s11
  %s14 = scalar_select 0, %s13, %s11
  $region1: #{tpu_custom_call.1} parent=0
    #allocation2 [shape = 'u8[32768]{0}', space=vmem, size = 0x8000, scoped, tag = 'input window, operand 2, single buffered']
    #allocation3 [shape = 's32[1]{0}', space=sflag, size = 0x4, scoped, tag = 'scoped memory for tpu_custom_call.1']
    #allocation4 [shape = 's32[1]{0}', space=sflag, size = 0x4, scoped, tag = 'scoped memory for tpu_custom_call.1']
    #allocation5 [shape = 'u8[512]{0}', space=vmem, size = 0x400, scoped, tag = 'input window, operand 3, single buffered']
    #allocation6 [shape = 's32[1]{0}', space=sflag, size = 0x4, scoped, tag = 'scoped memory for tpu_custom_call.1']
    #allocation7 [shape = 'u8[65536]{0}', space=vmem, size = 0x10000, scoped, tag = 'input window, operand 6, single buffered']
    #allocation8 [shape = 'u8[32768]{0}', space=vmem, size = 0x8000, scoped, tag = 'input window, operand 8, single buffered']
    #allocation9 [shape = 's32[1]{0}', space=sflag, size = 0x4, scoped, tag = 'scoped memory for tpu_custom_call.1']
    #allocation10 [shape = 'u8[4096]{0}', space=vmem, size = 0x1000, scoped, tag = 'output window, operand 0, single buffered']
    %15 = vsyncpa [#allocation3], 0
    %16 = vsyncpa [#allocation6], 0
    %17 = vsyncpa [#allocation9], 0
    %18 = vsyncpa [#allocation4], 0
    // Predicated region
    $region2: #{tpu_custom_call.1} parent=1 // pred_check
      _
    $region3: #{tpu_custom_call.1} parent=1 // pred_check_branch
      %20 = sbr.rel (0) target = $region5
    $region4: #{tpu_custom_call.1} parent=1 // pred_region
      _
    $region5: #{tpu_custom_call.1} parent=1 // pred_fallthru
      _
    // Predicated region
    $region6: #{tpu_custom_call.1} parent=1 // pred_check
      _
    $region7: #{tpu_custom_call.1} parent=1 // pred_check_branch
      %22 = sbr.rel (0) target = $region9
    $region8: #{tpu_custom_call.1} parent=1 // pred_region
      _
    $region9: #{tpu_custom_call.1} parent=1 // pred_fallthru
      _
    // Predicated region
    $region10: #{tpu_custom_call.1} parent=1 // pred_check
      _
    $region11: #{tpu_custom_call.1} parent=1 // pred_check_branch
      %24 = sbr.rel (0) target = $region13
    $region12: #{tpu_custom_call.1} parent=1 // pred_region
      %s26 = ssub.s32 1024, 1024
      %27 = vsyncadd [#allocation3], %s26
      %s28 = sshll.u32 [#allocation2], 4
      %s29 = int_to_ptr.vmem [resolvable:$true] %s28
      %34 = dma.hbm_to_vmem [thread:$0]  %s2, 1024, %s29, [#allocation3], 64, 64, 4
    $region13: #{tpu_custom_call.1} parent=1 // pred_fallthru
      _
    // Predicated region
    $region14: #{tpu_custom_call.1} parent=1 // pred_check
      _
    $region15: #{tpu_custom_call.1} parent=1 // pred_check_branch
      %36 = sbr.rel (0) target = $region17
    $region16: #{tpu_custom_call.1} parent=1 // pred_region
      %s38 = ssub.s32 16, 16
      %39 = vsyncadd [#allocation6], %s38
      %s41 = sshll.u32 [#allocation5], 4
      %s42 = int_to_ptr.vmem [resolvable:$true] %s41
      %44 = dma.hbm_to_vmem [thread:$0]  %s3, 16, %s42, [#allocation6]
    $region17: #{tpu_custom_call.1} parent=1 // pred_fallthru
      _
    // Predicated region
    $region18: #{tpu_custom_call.1} parent=1 // pred_check
      _
    $region19: #{tpu_custom_call.1} parent=1 // pred_check_branch
      %46 = sbr.rel (0) target = $region21
    $region20: #{tpu_custom_call.1} parent=1 // pred_region
      _
    $region21: #{tpu_custom_call.1} parent=1 // pred_fallthru
      _
    // Predicated region
    $region22: #{tpu_custom_call.1} parent=1 // pred_check
      _
    $region23: #{tpu_custom_call.1} parent=1 // pred_check_branch
      %48 = sbr.rel (0) target = $region25
    $region24: #{tpu_custom_call.1} parent=1 // pred_region
      _
    $region25: #{tpu_custom_call.1} parent=1 // pred_fallthru
      _
    // Predicated region
    $region26: #{tpu_custom_call.1} parent=1 // pred_check
      _
    $region27: #{tpu_custom_call.1} parent=1 // pred_check_branch
      %50 = sbr.rel (0) target = $region29
    $region28: #{tpu_custom_call.1} parent=1 // pred_region
      %s52 = ssub.s32 2048, 2048
      %53 = vsyncadd [#allocation6], %s52
      %s54 = sshll.u32 [#allocation7], 4
      %s55 = int_to_ptr.vmem [resolvable:$true] %s54
      %60 = dma.hbm_to_vmem [thread:$0]  %s6, 2048, %s55, [#allocation6], 64, 64, 4
    $region29: #{tpu_custom_call.1} parent=1 // pred_fallthru
      _
    // Predicated region
    $region30: #{tpu_custom_call.1} parent=1 // pred_check
      _
    $region31: #{tpu_custom_call.1} parent=1 // pred_check_branch
      %62 = sbr.rel (0) target = $region33
    $region32: #{tpu_custom_call.1} parent=1 // pred_region
      _
    $region33: #{tpu_custom_call.1} parent=1 // pred_fallthru
      _
    // Predicated region
    $region34: #{tpu_custom_call.1} parent=1 // pred_check
      _
    $region35: #{tpu_custom_call.1} parent=1 // pred_check_branch
      %64 = sbr.rel (0) target = $region37
    $region36: #{tpu_custom_call.1} parent=1 // pred_region
      %s66 = ssub.s32 1024, 1024
      %67 = vsyncadd [#allocation9], %s66
      %s68 = sshll.u32 [#allocation8], 4
      %s69 = int_to_ptr.vmem [resolvable:$true] %s68
      %74 = dma.hbm_to_vmem [thread:$0]  %s8, 1024, %s69, [#allocation9], 64, 64, 4
    $region37: #{tpu_custom_call.1} parent=1 // pred_fallthru
      _
    // Predicated region
    $region38: #{tpu_custom_call.1} parent=1 // pred_check
      _
    $region39: #{tpu_custom_call.1} parent=1 // pred_check_branch
      %76 = sbr.rel (0) target = $region41
    $region40: #{tpu_custom_call.1} parent=1 // pred_region
      _
    $region41: #{tpu_custom_call.1} parent=1 // pred_fallthru
      _
    // Predicated region
    $region42: #{tpu_custom_call.1} parent=1 // pred_check
      _
    $region43: #{tpu_custom_call.1} parent=1 // pred_check_branch
      %78 = sbr.rel (0) target = $region45
    $region44: #{tpu_custom_call.1} parent=1 // pred_region
      %79 = dma.done [#allocation3], 1024
    $region45: #{tpu_custom_call.1} parent=1 // pred_fallthru
      _
    // Predicated region
    $region46: #{tpu_custom_call.1} parent=1 // pred_check
      _
    $region47: #{tpu_custom_call.1} parent=1 // pred_check_branch
      %81 = sbr.rel (0) target = $region49
    $region48: #{tpu_custom_call.1} parent=1 // pred_region
      %82 = dma.done [#allocation6], 16
    $region49: #{tpu_custom_call.1} parent=1 // pred_fallthru
      _
    // Predicated region
    $region50: #{tpu_custom_call.1} parent=1 // pred_check
      _
    $region51: #{tpu_custom_call.1} parent=1 // pred_check_branch
      %84 = sbr.rel (0) target = $region53
    $region52: #{tpu_custom_call.1} parent=1 // pred_region
      %85 = dma.done [#allocation6], 2048
    $region53: #{tpu_custom_call.1} parent=1 // pred_fallthru
      _
    // Predicated region
    $region54: #{tpu_custom_call.1} parent=1 // pred_check
      _
    $region55: #{tpu_custom_call.1} parent=1 // pred_check_branch
      %87 = sbr.rel (0) target = $region57
    $region56: #{tpu_custom_call.1} parent=1 // pred_region
      %88 = dma.done [#allocation9], 1024
    $region57: #{tpu_custom_call.1} parent=1 // pred_fallthru
      _
    %v90 = vld [vmem:[%s0] sm:$0xff]
    %v91 = vld [vmem:[%s0 + $0x8] sm:$0xff]
    %v92 = vlaneseq
    %v93 = vand.u32 %v92, 127
    %v94 = vld [vmem:[%s1] sm:$0xff]
    %v95 = vld [vmem:[%s1 + $0x8] sm:$0xff]
    %96 = vset.pattern.permute.xlu0 0
    %97 = vperm.xlu0 %96, %v94
    %v98 = vpop.permute.xlu0 %97
    %99 = vset.pattern.permute.xlu0 0
    %100 = vperm.xlu0 %99, %v95
    %v101 = vpop.permute.xlu0 %100
    %v102 = vshrl.u32 %v98, %v93
    %v103 = vshrl.u32 %v101, %v93
    %v104 = vand.u32 %v102, 1
    %v105 = vand.u32 %v103, 1
    %v106 = vcvt.s32.f32 %v104
    %v107 = vcvt.s32.f32 %v105
    %v108 = vpack.c.bf16 %v107, %v106
    %v109 = vpack.c.bf16 %v91, %v90
    %v110 = vld [vmem:[#allocation2] sm:$0xf]
    %v111 = vld [vmem:[#allocation2 + $0x4] sm:$0xf]
    %v112 = vld [vmem:[#allocation2 + $0x8] sm:$0xf]
    %v113 = vld [vmem:[#allocation2 + $0xc] sm:$0xf]
    %v114 = vld [vmem:[#allocation2 + $0x10] sm:$0xf]
    %v115 = vld [vmem:[#allocation2 + $0x14] sm:$0xf]
    %v116 = vld [vmem:[#allocation2 + $0x18] sm:$0xf]
    %v117 = vld [vmem:[#allocation2 + $0x1c] sm:$0xf]
    %v118 = vld [vmem:[#allocation2 + $0x20] sm:$0xf]
    %v119 = vld [vmem:[#allocation2 + $0x24] sm:$0xf]
    %v120 = vld [vmem:[#allocation2 + $0x28] sm:$0xf]
    %v121 = vld [vmem:[#allocation2 + $0x2c] sm:$0xf]
    %v122 = vld [vmem:[#allocation2 + $0x30] sm:$0xf]
    %v123 = vld [vmem:[#allocation2 + $0x34] sm:$0xf]
    %v124 = vld [vmem:[#allocation2 + $0x38] sm:$0xf]
    %v125 = vld [vmem:[#allocation2 + $0x3c] sm:$0xf]
    %v126 = vld [vmem:[#allocation5] sm:$0x1]
    %v128 = vlaneseq
    %v129 = vshrl.u32 %v128, 7
    %v130 = vsub.s32 0, %v129
    %v131 = vrot.slane %v126, %v130
    %v149 = vunpack.c.l.b16 %v110
    %v150 = vunpack.c.l.b16 %v111
    %v151 = vunpack.c.l.b16 %v112
    %v152 = vunpack.c.l.b16 %v113
    %v153 = vunpack.c.l.b16 %v114
    %v154 = vunpack.c.l.b16 %v115
    %v155 = vunpack.c.l.b16 %v116
    %v156 = vunpack.c.l.b16 %v117
    %v157 = vunpack.c.l.b16 %v118
    %v158 = vunpack.c.l.b16 %v119
    %v159 = vunpack.c.l.b16 %v120
    %v160 = vunpack.c.l.b16 %v121
    %v161 = vunpack.c.l.b16 %v122
    %v162 = vunpack.c.l.b16 %v123
    %v163 = vunpack.c.l.b16 %v124
    %v164 = vunpack.c.l.b16 %v125
    %v165 = vpack.c.b16 %v150, %v149
    %v166 = vpack.c.b16 %v152, %v151
    %v167 = vpack.c.b16 %v154, %v153
    %v168 = vpack.c.b16 %v156, %v155
    %v169 = vpack.c.b16 %v158, %v157
    %v170 = vpack.c.b16 %v160, %v159
    %v171 = vpack.c.b16 %v162, %v161
    %v172 = vpack.c.b16 %v164, %v163
    %181 = vmatprep.subr.bf16.mxu0 0
    %182 = vmatpush1.bf16.msra.mxu0 %v165
    %183 = vmatprep.subr.bf16.mxu0 0
    %184 = vmatpush1.bf16.msra.mxu0 %v166
    %185 = vmatprep.subr.bf16.mxu0 0
    %186 = vmatpush1.bf16.msra.mxu0 %v167
    %187 = vmatprep.subr.bf16.mxu0 0
    %188 = vmatpush1.bf16.msra.mxu0 %v168
    %189 = vmatprep.subr.bf16.mxu0 0
    %190 = vmatpush1.bf16.msra.mxu0 %v169
    %191 = vmatprep.subr.bf16.mxu0 0
    %192 = vmatpush1.bf16.msra.mxu0 %v170
    %193 = vmatprep.subr.bf16.mxu0 0
    %194 = vmatpush1.bf16.msra.mxu0 %v171
    %195 = vmatprep.subr.bf16.mxu0 0
    %196 = vmatpush1.bf16.msra.mxu0 %v172
    %197 = vmatprep.subr.bf16.mxu0 0
    %198 = vmatpush1.bf16.msra.mxu0 0
    %199 = vmatprep.subr.bf16.mxu0 0
    %200 = vmatpush1.bf16.msra.mxu0 0
    %201 = vmatprep.subr.bf16.mxu0 0
    %202 = vmatpush1.bf16.msra.mxu0 0
    %203 = vmatprep.subr.bf16.mxu0 0
    %204 = vmatpush1.bf16.msra.mxu0 0
    %205 = vmatprep.subr.bf16.mxu0 0
    %206 = vmatpush1.bf16.msra.mxu0 0
    %207 = vmatprep.subr.bf16.mxu0 0
    %208 = vmatpush1.bf16.msra.mxu0 0
    %209 = vmatprep.subr.bf16.mxu0 0
    %210 = vmatpush1.bf16.msra.mxu0 0
    %211 = vmatprep.subr.bf16.mxu0 0
    %212 = vmatpush1.bf16.msra.mxu0 0
    %213 = vmatprep.mubr.bf16.mxu0 0
    %214 = vmatmul.mubr.bf16.gmra.mrb[0].mxu0 %v109
    %v215 = vpop.f32.mrb[0].mxu0
    %v216 = vadd.f32 %v131, %v215
    %v217 = vpop.f32.mrb[0].mxu0
    %v218 = vpop.f32.mrb[0].mxu0
    %v219 = vadd.f32 %v131, %v218
    %v220 = vpop.f32.mrb[0].mxu0
    %221 = vdwg.mxu0
    %v222 = vmax.f32 %v216, 0.0
    %v223 = vmax.f32 %v219, 0.0
    %v224 = vld [vmem:[%s4] sm:$0xf]
    %v225 = vld [vmem:[%s4 + $0x4] sm:$0xf]
    %v226 = vld [vmem:[%s4 + $0x8] sm:$0xf]
    %v227 = vld [vmem:[%s4 + $0xc] sm:$0xf]
    %v228 = vld [vmem:[%s5] sm:$0x1]
    %v230 = vlaneseq
    %v231 = vshrl.u32 %v230, 7
    %v232 = vsub.s32 0, %v231
    %v233 = vrot.slane %v228, %v232
    %v239 = vunpack.c.l.b16 %v224
    %v240 = vunpack.c.l.b16 %v225
    %v241 = vunpack.c.l.b16 %v226
    %v242 = vunpack.c.l.b16 %v227
    %v243 = vpack.c.b16 %v240, %v239
    %v244 = vpack.c.b16 %v242, %v241
    %vm247 = vcmask 261120
    %v249 = vsel %vm247, %v108, 0
    %251 = vmatprep.subr.bf16.mxu0 0
    %252 = vmatpush1.bf16.msra.mxu0 %v243
    %253 = vmatprep.subr.bf16.mxu0 0
    %254 = vmatpush1.bf16.msra.mxu0 %v244
    %255 = vmatprep.subr.bf16.mxu0 0
    %256 = vmatpush1.bf16.msra.mxu0 0
    %257 = vmatprep.subr.bf16.mxu0 0
    %258 = vmatpush1.bf16.msra.mxu0 0
    %259 = vmatprep.subr.bf16.mxu0 0
    %260 = vmatpush1.bf16.msra.mxu0 0
    %261 = vmatprep.subr.bf16.mxu0 0
    %262 = vmatpush1.bf16.msra.mxu0 0
    %263 = vmatprep.subr.bf16.mxu0 0
    %264 = vmatpush1.bf16.msra.mxu0 0
    %265 = vmatprep.subr.bf16.mxu0 0
    %266 = vmatpush1.bf16.msra.mxu0 0
    %267 = vmatprep.subr.bf16.mxu0 0
    %268 = vmatpush1.bf16.msra.mxu0 0
    %269 = vmatprep.subr.bf16.mxu0 0
    %270 = vmatpush1.bf16.msra.mxu0 0
    %271 = vmatprep.subr.bf16.mxu0 0
    %272 = vmatpush1.bf16.msra.mxu0 0
    %273 = vmatprep.subr.bf16.mxu0 0
    %274 = vmatpush1.bf16.msra.mxu0 0
    %275 = vmatprep.subr.bf16.mxu0 0
    %276 = vmatpush1.bf16.msra.mxu0 0
    %277 = vmatprep.subr.bf16.mxu0 0
    %278 = vmatpush1.bf16.msra.mxu0 0
    %279 = vmatprep.subr.bf16.mxu0 0
    %280 = vmatpush1.bf16.msra.mxu0 0
    %281 = vmatprep.subr.bf16.mxu0 0
    %282 = vmatpush1.bf16.msra.mxu0 0
    %283 = vmatprep.mubr.bf16.mxu0 0
    %284 = vmatmul.mubr.bf16.gmra.mrb[0].mxu0 %v249
    %v285 = vpop.f32.mrb[0].mxu0
    %v286 = vadd.f32 %v233, %v285
    %v287 = vpop.f32.mrb[0].mxu0
    %v288 = vpop.f32.mrb[0].mxu0
    %v289 = vadd.f32 %v233, %v288
    %v290 = vpop.f32.mrb[0].mxu0
    %291 = vdwg.mxu0
    %v292 = vmax.f32 %v286, 0.0
    %v293 = vmax.f32 %v289, 0.0
    %v294 = vpack.c.bf16 %v223, %v222
    %v295 = vpack.c.bf16 %v293, %v292
    %v296 = vld [vmem:[#allocation7] sm:$0xf]
    %v297 = vld [vmem:[#allocation7 + $0x4] sm:$0xf]
    %v298 = vld [vmem:[#allocation7 + $0x8] sm:$0xf]
    %v299 = vld [vmem:[#allocation7 + $0xc] sm:$0xf]
    %v300 = vld [vmem:[#allocation7 + $0x10] sm:$0xf]
    %v301 = vld [vmem:[#allocation7 + $0x14] sm:$0xf]
    %v302 = vld [vmem:[#allocation7 + $0x18] sm:$0xf]
    %v303 = vld [vmem:[#allocation7 + $0x1c] sm:$0xf]
    %v304 = vld [vmem:[#allocation7 + $0x20] sm:$0xf]
    %v305 = vld [vmem:[#allocation7 + $0x24] sm:$0xf]
    %v306 = vld [vmem:[#allocation7 + $0x28] sm:$0xf]
    %v307 = vld [vmem:[#allocation7 + $0x2c] sm:$0xf]
    %v308 = vld [vmem:[#allocation7 + $0x30] sm:$0xf]
    %v309 = vld [vmem:[#allocation7 + $0x34] sm:$0xf]
    %v310 = vld [vmem:[#allocation7 + $0x38] sm:$0xf]
    %v311 = vld [vmem:[#allocation7 + $0x3c] sm:$0xf]
    %v312 = vld [vmem:[#allocation7 + $0x40] sm:$0xf]
    %v313 = vld [vmem:[#allocation7 + $0x44] sm:$0xf]
    %v314 = vld [vmem:[#allocation7 + $0x48] sm:$0xf]
    %v315 = vld [vmem:[#allocation7 + $0x4c] sm:$0xf]
    %v316 = vld [vmem:[#allocation7 + $0x50] sm:$0xf]
    %v317 = vld [vmem:[#allocation7 + $0x54] sm:$0xf]
    %v318 = vld [vmem:[#allocation7 + $0x58] sm:$0xf]
    %v319 = vld [vmem:[#allocation7 + $0x5c] sm:$0xf]
    %v320 = vld [vmem:[#allocation7 + $0x60] sm:$0xf]
    %v321 = vld [vmem:[#allocation7 + $0x64] sm:$0xf]
    %v322 = vld [vmem:[#allocation7 + $0x68] sm:$0xf]
    %v323 = vld [vmem:[#allocation7 + $0x6c] sm:$0xf]
    %v324 = vld [vmem:[#allocation7 + $0x70] sm:$0xf]
    %v325 = vld [vmem:[#allocation7 + $0x74] sm:$0xf]
    %v326 = vld [vmem:[#allocation7 + $0x78] sm:$0xf]
    %v327 = vld [vmem:[#allocation7 + $0x7c] sm:$0xf]
    %v328 = vld [vmem:[%s7] sm:$0x1]
    %v330 = vlaneseq
    %v331 = vshrl.u32 %v330, 7
    %v332 = vsub.s32 0, %v331
    %v333 = vrot.slane %v328, %v332
    %v367 = vunpack.c.l.b16 %v296
    %v368 = vunpack.c.l.b16 %v297
    %v369 = vunpack.c.l.b16 %v298
    %v370 = vunpack.c.l.b16 %v299
    %v371 = vunpack.c.l.b16 %v300
    %v372 = vunpack.c.l.b16 %v301
    %v373 = vunpack.c.l.b16 %v302
    %v374 = vunpack.c.l.b16 %v303
    %v375 = vunpack.c.l.b16 %v304
    %v376 = vunpack.c.l.b16 %v305
    %v377 = vunpack.c.l.b16 %v306
    %v378 = vunpack.c.l.b16 %v307
    %v379 = vunpack.c.l.b16 %v308
    %v380 = vunpack.c.l.b16 %v309
    %v381 = vunpack.c.l.b16 %v310
    %v382 = vunpack.c.l.b16 %v311
    %v383 = vunpack.c.l.b16 %v312
    %v384 = vunpack.c.l.b16 %v313
    %v385 = vunpack.c.l.b16 %v314
    %v386 = vunpack.c.l.b16 %v315
    %v387 = vunpack.c.l.b16 %v316
    %v388 = vunpack.c.l.b16 %v317
    %v389 = vunpack.c.l.b16 %v318
    %v390 = vunpack.c.l.b16 %v319
    %v391 = vunpack.c.l.b16 %v320
    %v392 = vunpack.c.l.b16 %v321
    %v393 = vunpack.c.l.b16 %v322
    %v394 = vunpack.c.l.b16 %v323
    %v395 = vunpack.c.l.b16 %v324
    %v396 = vunpack.c.l.b16 %v325
    %v397 = vunpack.c.l.b16 %v326
    %v398 = vunpack.c.l.b16 %v327
    %v399 = vpack.c.b16 %v368, %v367
    %v400 = vpack.c.b16 %v370, %v369
    %v401 = vpack.c.b16 %v372, %v371
    %v402 = vpack.c.b16 %v374, %v373
    %v403 = vpack.c.b16 %v376, %v375
    %v404 = vpack.c.b16 %v378, %v377
    %v405 = vpack.c.b16 %v380, %v379
    %v406 = vpack.c.b16 %v382, %v381
    %v407 = vpack.c.b16 %v384, %v383
    %v408 = vpack.c.b16 %v386, %v385
    %v409 = vpack.c.b16 %v388, %v387
    %v410 = vpack.c.b16 %v390, %v389
    %v411 = vpack.c.b16 %v392, %v391
    %v412 = vpack.c.b16 %v394, %v393
    %v413 = vpack.c.b16 %v396, %v395
    %v414 = vpack.c.b16 %v398, %v397
    %431 = vmatprep.subr.bf16.mxu0 0
    %432 = vmatpush1.bf16.msra.mxu0 %v399
    %433 = vmatprep.subr.bf16.mxu0 0
    %434 = vmatpush1.bf16.msra.mxu0 %v400
    %435 = vmatprep.subr.bf16.mxu0 0
    %436 = vmatpush1.bf16.msra.mxu0 %v401
    %437 = vmatprep.subr.bf16.mxu0 0
    %438 = vmatpush1.bf16.msra.mxu0 %v402
    %439 = vmatprep.subr.bf16.mxu0 0
    %440 = vmatpush1.bf16.msra.mxu0 %v403
    %441 = vmatprep.subr.bf16.mxu0 0
    %442 = vmatpush1.bf16.msra.mxu0 %v404
    %443 = vmatprep.subr.bf16.mxu0 0
    %444 = vmatpush1.bf16.msra.mxu0 %v405
    %445 = vmatprep.subr.bf16.mxu0 0
    %446 = vmatpush1.bf16.msra.mxu0 %v406
    %447 = vmatprep.subr.bf16.mxu0 0
    %448 = vmatpush1.bf16.msra.mxu0 %v407
    %449 = vmatprep.subr.bf16.mxu0 0
    %450 = vmatpush1.bf16.msra.mxu0 %v408
    %451 = vmatprep.subr.bf16.mxu0 0
    %452 = vmatpush1.bf16.msra.mxu0 %v409
    %453 = vmatprep.subr.bf16.mxu0 0
    %454 = vmatpush1.bf16.msra.mxu0 %v410
    %455 = vmatprep.subr.bf16.mxu0 0
    %456 = vmatpush1.bf16.msra.mxu0 %v411
    %457 = vmatprep.subr.bf16.mxu0 0
    %458 = vmatpush1.bf16.msra.mxu0 %v412
    %459 = vmatprep.subr.bf16.mxu0 0
    %460 = vmatpush1.bf16.msra.mxu0 %v413
    %461 = vmatprep.subr.bf16.mxu0 0
    %462 = vmatpush1.bf16.msra.mxu0 %v414
    %463 = vmatprep.mubr.bf16.mxu0 %v295
    %464 = vmatmul.mubr.bf16.gmra.mrb[0].mxu0 %v294
    %v465 = vpop.f32.mrb[0].mxu0
    %v466 = vadd.f32 %v333, %v465
    %v467 = vpop.f32.mrb[0].mxu0
    %v468 = vpop.f32.mrb[0].mxu0
    %v469 = vadd.f32 %v333, %v468
    %v470 = vpop.f32.mrb[0].mxu0
    %471 = vdwg.mxu0
    %v472 = vmax.f32 %v466, 0.0
    %v473 = vmax.f32 %v469, 0.0
    %v474 = vpack.c.bf16 %v473, %v472
    %v475 = vld [vmem:[#allocation8] sm:$0xf]
    %v476 = vld [vmem:[#allocation8 + $0x4] sm:$0xf]
    %v477 = vld [vmem:[#allocation8 + $0x8] sm:$0xf]
    %v478 = vld [vmem:[#allocation8 + $0xc] sm:$0xf]
    %v479 = vld [vmem:[#allocation8 + $0x10] sm:$0xf]
    %v480 = vld [vmem:[#allocation8 + $0x14] sm:$0xf]
    %v481 = vld [vmem:[#allocation8 + $0x18] sm:$0xf]
    %v482 = vld [vmem:[#allocation8 + $0x1c] sm:$0xf]
    %v483 = vld [vmem:[#allocation8 + $0x20] sm:$0xf]
    %v484 = vld [vmem:[#allocation8 + $0x24] sm:$0xf]
    %v485 = vld [vmem:[#allocation8 + $0x28] sm:$0xf]
    %v486 = vld [vmem:[#allocation8 + $0x2c] sm:$0xf]
    %v487 = vld [vmem:[#allocation8 + $0x30] sm:$0xf]
    %v488 = vld [vmem:[#allocation8 + $0x34] sm:$0xf]
    %v489 = vld [vmem:[#allocation8 + $0x38] sm:$0xf]
    %v490 = vld [vmem:[#allocation8 + $0x3c] sm:$0xf]
    %v491 = vld [vmem:[%s9] sm:$0x1]
    %v493 = vlaneseq
    %v494 = vshrl.u32 %v493, 7
    %v495 = vsub.s32 0, %v494
    %v496 = vrot.slane %v491, %v495
    %v514 = vunpack.c.l.b16 %v475
    %v515 = vunpack.c.l.b16 %v476
    %v516 = vunpack.c.l.b16 %v477
    %v517 = vunpack.c.l.b16 %v478
    %v518 = vunpack.c.l.b16 %v479
    %v519 = vunpack.c.l.b16 %v480
    %v520 = vunpack.c.l.b16 %v481
    %v521 = vunpack.c.l.b16 %v482
    %v522 = vunpack.c.l.b16 %v483
    %v523 = vunpack.c.l.b16 %v484
    %v524 = vunpack.c.l.b16 %v485
    %v525 = vunpack.c.l.b16 %v486
    %v526 = vunpack.c.l.b16 %v487
    %v527 = vunpack.c.l.b16 %v488
    %v528 = vunpack.c.l.b16 %v489
    %v529 = vunpack.c.l.b16 %v490
    %v530 = vpack.c.b16 %v515, %v514
    %v531 = vpack.c.b16 %v517, %v516
    %v532 = vpack.c.b16 %v519, %v518
    %v533 = vpack.c.b16 %v521, %v520
    %v534 = vpack.c.b16 %v523, %v522
    %v535 = vpack.c.b16 %v525, %v524
    %v536 = vpack.c.b16 %v527, %v526
    %v537 = vpack.c.b16 %v529, %v528
    %546 = vmatprep.subr.bf16.mxu0 0
    %547 = vmatpush1.bf16.msra.mxu0 %v530
    %548 = vmatprep.subr.bf16.mxu0 0
    %549 = vmatpush1.bf16.msra.mxu0 %v531
    %550 = vmatprep.subr.bf16.mxu0 0
    %551 = vmatpush1.bf16.msra.mxu0 %v532
    %552 = vmatprep.subr.bf16.mxu0 0
    %553 = vmatpush1.bf16.msra.mxu0 %v533
    %554 = vmatprep.subr.bf16.mxu0 0
    %555 = vmatpush1.bf16.msra.mxu0 %v534
    %556 = vmatprep.subr.bf16.mxu0 0
    %557 = vmatpush1.bf16.msra.mxu0 %v535
    %558 = vmatprep.subr.bf16.mxu0 0
    %559 = vmatpush1.bf16.msra.mxu0 %v536
    %560 = vmatprep.subr.bf16.mxu0 0
    %561 = vmatpush1.bf16.msra.mxu0 %v537
    %562 = vmatprep.subr.bf16.mxu0 0
    %563 = vmatpush1.bf16.msra.mxu0 0
    %564 = vmatprep.subr.bf16.mxu0 0
    %565 = vmatpush1.bf16.msra.mxu0 0
    %566 = vmatprep.subr.bf16.mxu0 0
    %567 = vmatpush1.bf16.msra.mxu0 0
    %568 = vmatprep.subr.bf16.mxu0 0
    %569 = vmatpush1.bf16.msra.mxu0 0
    %570 = vmatprep.subr.bf16.mxu0 0
    %571 = vmatpush1.bf16.msra.mxu0 0
    %572 = vmatprep.subr.bf16.mxu0 0
    %573 = vmatpush1.bf16.msra.mxu0 0
    %574 = vmatprep.subr.bf16.mxu0 0
    %575 = vmatpush1.bf16.msra.mxu0 0
    %576 = vmatprep.subr.bf16.mxu0 0
    %577 = vmatpush1.bf16.msra.mxu0 0
    %578 = vmatprep.mubr.bf16.mxu0 0
    %579 = vmatmul.mubr.bf16.gmra.mrb[0].mxu0 %v474
    %v580 = vpop.f32.mrb[0].mxu0
    %v581 = vadd.f32 %v496, %v580
    %v582 = vpop.f32.mrb[0].mxu0
    %v583 = vpop.f32.mrb[0].mxu0
    %v584 = vadd.f32 %v496, %v583
    %v585 = vpop.f32.mrb[0].mxu0
    %586 = vdwg.mxu0
    %v587 = vmul.f32 %v581, %v581
    %v588 = vmul.f32 %v584, %v584
    %589 = vadd.xlane.f32.xlu0 %v587
    %v590 = vpop.xlane.xlu0 %589
    %591 = vadd.xlane.f32.xlu0 %v588
    %v592 = vpop.xlane.xlu0 %591
    %v593 = vadd.f32 %v590, 1e-12
    %v594 = vadd.f32 %v592, 1e-12
    %v595 = vrsqrt.pop %v593
    %v596 = vrsqrt.pop %v594
    %v597 = vmul.f32 %v581, %v595
    %v598 = vmul.f32 %v584, %v596
    %v599 = vpack.c.bf16 %v598, %v597
    %v601 = vunpack.c.l.b16 %v599
    %v602 = vunpack.c.h.b16 %v599
    %v603 = vpack.c.b16 %v601, %v601
    %v604 = vpack.c.b16 %v602, %v602
    %607 = vst [vmem:[#allocation10] sm:$0xf] %v603
    %608 = vst [vmem:[#allocation10 + $0x4] sm:$0xf] %v604
    // Predicated region
    $region58: #{tpu_custom_call.1} parent=1 // pred_check
      _
    $region59: #{tpu_custom_call.1} parent=1 // pred_check_branch
      %610 = sbr.rel (0) target = $region61
    $region60: #{tpu_custom_call.1} parent=1 // pred_region
      %s612 = ssub.s32 128, 128
      %613 = vsyncadd [#allocation4], %s612
      %s614 = sshll.u32 [#allocation10], 4
      %s615 = int_to_ptr.vmem [resolvable:$true] %s614
      %620 = dma.vmem_to_hbm [thread:$0]  %s615, 128, %s10, [#allocation4], 64, 64, 4
    $region61: #{tpu_custom_call.1} parent=1 // pred_fallthru
      _
    // Predicated region
    $region62: #{tpu_custom_call.1} parent=1 // pred_check
      _
    $region63: #{tpu_custom_call.1} parent=1 // pred_check_branch
      %622 = sbr.rel (0) target = $region65
    $region64: #{tpu_custom_call.1} parent=1 // pred_region
      %623 = dma.done [#allocation4], 128
    $region65: #{tpu_custom_call.1} parent=1 // pred_fallthru
      _
    %624 = vsyncpa [#allocation3], 1
    %625 = vsyncpa [#allocation6], 1
    %626 = vsyncpa [#allocation9], 1
    %627 = vsyncpa [#allocation4], 1

</llo_original>
